<compile_context>
chip_gen: v6e
topology: v6e:2x2x1
jax: 0.10.0
libtpu: 0.0.40
codegen_flags: <defaults>
</compile_context>

<pallas_src>
import functools
import math

import jax
import jax.numpy as jnp
from jax.experimental import pallas as pl
from jax.experimental.pallas import tpu as pltpu

LANE = 128
MAX_BLOCK_ROWS = 1024  # (1024, 128) f32 = 0.5 MiB per buffer; ~2.5 MiB live VMEM
EPSILON = 1e-8


def _mape_kernel(pred_ref, true_ref, out_ref, acc_ref, *, n_valid, scale):
    """One (block_rows, 128) tile per grid step; full-tile VMEM accumulator."""
    step = pl.program_id(0)

    @pl.when(step == 0)
    def _():
        acc_ref[...] = jnp.zeros_like(acc_ref)

    block_rows, lanes = pred_ref.shape

    # Global flat element index of every slot in this tile; mask out the
    # ragged tail (lane padding and/or the partial last block, whose contents
    # are unspecified).
    row_ids = (jax.lax.broadcasted_iota(jnp.int32, (block_rows, lanes), 0)
               + step * block_rows)
    col_ids = jax.lax.broadcasted_iota(jnp.int32, (block_rows, lanes), 1)
    flat_ids = row_ids * lanes + col_ids
    mask = flat_ids < n_valid

    # Sanitize masked slots to pred == true == 1.0 so they contribute exactly 0
    # and the division is always well-defined.  Cast to f32 inside the tile.
    p = jnp.where(mask, pred_ref[...].astype(jnp.float32), 1.0)
    t = jnp.where(mask, true_ref[...].astype(jnp.float32), 1.0)

    acc_ref[...] += jnp.abs((t - p) / (t + EPSILON))

    @pl.when(step == pl.num_programs(0) - 1)
    def _():
        # Single end-of-grid cross-lane/sublane reduction + mean*100 scaling.
        out_ref[...] = (jnp.sum(acc_ref[...], axis=(0, 1), keepdims=True)
                        * scale)


def mape_loss(y_pred, y_true, *, max_block_rows=MAX_BLOCK_ROWS):
    """Pallas-backed equivalent of MAPELoss.forward (returns scalar f32)."""
    assert y_pred.shape == y_true.shape
    n = int(math.prod(y_pred.shape))
    assert n > 0

    pred_flat = y_pred.reshape(-1)
    true_flat = y_true.reshape(-1)

    # Pad only the (rare) non-128-aligned tail so a (rows, 128) view exists;
    # padded elements are excluded by the in-kernel mask.
    lane_pad = (-n) % LANE
    if lane_pad:
        pred_flat = jnp.pad(pred_flat, (0, lane_pad))
        true_flat = jnp.pad(true_flat, (0, lane_pad))
    rows = (n + lane_pad) // LANE

    pred2 = pred_flat.reshape(rows, LANE)
    true2 = true_flat.reshape(rows, LANE)

    if rows <= max_block_rows:
        block_rows = rows            # single full-extent block (always legal)
    else:
        block_rows = max_block_rows  # multiple of 8; ragged last block masked

    num_blocks = pl.cdiv(rows, block_rows)

    kernel = functools.partial(_mape_kernel,
                               n_valid=n,
                               scale=100.0 / float(n))

    out = pl.pallas_call(
        kernel,
        out_shape=jax.ShapeDtypeStruct((1, 1), jnp.float32),
        grid_spec=pltpu.PrefetchScalarGridSpec(
            num_scalar_prefetch=0,
            grid=(num_blocks,),
            in_specs=[
                pl.BlockSpec((block_rows, LANE), lambda i: (i, 0)),
                pl.BlockSpec((block_rows, LANE), lambda i: (i, 0)),
            ],
            out_specs=pl.BlockSpec((1, 1), lambda i: (0, 0)),
            scratch_shapes=[pltpu.VMEM((block_rows, LANE), jnp.float32)],
        ),
        compiler_params=pltpu.CompilerParams(
            dimension_semantics=("arbitrary",)),
    )(pred2, true2)
    return out[0, 0]


def _reference_mape(y_pred, y_true):
    """Pure-jnp reference mirroring the PyTorch module."""
    p = y_pred.astype(jnp.float32)
    t = y_true.astype(jnp.float32)
    return jnp.mean(jnp.abs((t - p) / (t + EPSILON)) * 100.0)


if __name__ == "__main__":
    key = jax.random.PRNGKey(0)
    k_pred, k_true = jax.random.split(key)
    # Keep targets away from zero so MAPE is well-conditioned for the check.
    y_pred = jax.random.uniform(k_pred, (2, 4, 16, 16),
                                dtype=jnp.float32, minval=0.0, maxval=3.0)
    y_true = jax.random.uniform(k_true, (2, 4, 16, 16),
                                dtype=jnp.float32, minval=0.2, maxval=3.0)

    loss = mape_loss(y_pred, y_true)
    loss = jax.block_until_ready(loss)

    ref = _reference_mape(y_pred, y_true)
    assert jnp.allclose(loss, ref, rtol=1e-5, atol=1e-5), (loss, ref)

    print("KERNEL_OK")
</pallas_src>

<mosaic_0001>
module attributes {stable_mosaic.version = 11 : i64} {
  func.func @_mape_kernel(%arg0: i32, %arg1: memref<16x128xf32, #tpu.memory_space<vmem>>, %arg2: memref<16x128xf32, #tpu.memory_space<vmem>>, %arg3: memref<1x1xf32, #tpu.memory_space<vmem>>, %arg4: memref<16x128xf32, #tpu.memory_space<vmem>>) attributes {dimension_semantics = [#tpu.dimension_semantics<arbitrary>], iteration_bounds = array<i64: 1>, scalar_prefetch = 0 : i64, scratch_operands = 1 : i64, tpu.core_type = #tpu.core_type<tc>, window_params = [{transform_indices = @transform_0, window_bounds = array<i64: 16, 128>}, {transform_indices = @transform_1, window_bounds = array<i64: 16, 128>}, {pipeline_mode = #tpu.pipeline_mode<synchronous>, transform_indices = @transform_2, window_bounds = array<i64: 1, 1>}]} {
    %c0_i32 = arith.constant 0 : i32
    %0 = arith.cmpi eq, %arg0, %c0_i32 : i32
    %1 = arith.extui %0 : i1 to i32
    %c0_i32_0 = arith.constant 0 : i32
    %2 = arith.cmpi ne, %1, %c0_i32_0 : i32
    scf.if %2 {
      %cst_12 = arith.constant 0.000000e+00 : f32
      %30 = vector.broadcast %cst_12 : f32 to vector<16x128xf32>
      %c0_13 = arith.constant 0 : index
      %c0_14 = arith.constant 0 : index
      %31 = vector.load %arg4[%c0_13, %c0_14] : memref<16x128xf32, #tpu.memory_space<vmem>>, vector<16x128xf32>
      tpu.vector_store %arg4[%c0_13, %c0_14], %30 {strides = array<i32>} : memref<16x128xf32, #tpu.memory_space<vmem>>, vector<16x128xf32>,
    } else {
    }
    %3 = tpu.iota {dimensions = array<i32: 0>} : vector<16x128xi32>
    %c16_i32 = arith.constant 16 : i32
    %4 = arith.muli %arg0, %c16_i32 : i32
    %5 = vector.broadcast %4 : i32 to vector<16x128xi32>
    %6 = arith.addi %3, %5 : vector<16x128xi32>
    %7 = tpu.iota {dimensions = array<i32: 1>} : vector<16x128xi32>
    %c128_i32 = arith.constant 128 : i32
    %8 = vector.broadcast %c128_i32 : i32 to vector<16x128xi32>
    %9 = arith.muli %6, %8 : vector<16x128xi32>
    %10 = arith.addi %9, %7 : vector<16x128xi32>
    %c2048_i32 = arith.constant 2048 : i32
    %11 = vector.broadcast %c2048_i32 : i32 to vector<16x128xi32>
    %12 = arith.cmpi slt, %10, %11 : vector<16x128xi32>
    %c0 = arith.constant 0 : index
    %c0_1 = arith.constant 0 : index
    %13 = vector.load %arg1[%c0, %c0_1] : memref<16x128xf32, #tpu.memory_space<vmem>>, vector<16x128xf32>
    %cst = arith.constant 1.000000e+00 : f32
    %14 = vector.broadcast %cst : f32 to vector<16x128xf32>
    %15 = arith.select %12, %13, %14 : vector<16x128xi1>, vector<16x128xf32>
    %c0_2 = arith.constant 0 : index
    %c0_3 = arith.constant 0 : index
    %16 = vector.load %arg2[%c0_2, %c0_3] : memref<16x128xf32, #tpu.memory_space<vmem>>, vector<16x128xf32>
    %cst_4 = arith.constant 1.000000e+00 : f32
    %17 = vector.broadcast %cst_4 : f32 to vector<16x128xf32>
    %18 = arith.select %12, %16, %17 : vector<16x128xi1>, vector<16x128xf32>
    %c0_5 = arith.constant 0 : index
    %c0_6 = arith.constant 0 : index
    %19 = vector.load %arg4[%c0_5, %c0_6] : memref<16x128xf32, #tpu.memory_space<vmem>>, vector<16x128xf32>
    %20 = arith.subf %18, %15 : vector<16x128xf32>
    %cst_7 = arith.constant 9.99999993E-9 : f32
    %21 = vector.broadcast %cst_7 : f32 to vector<16x128xf32>
    %22 = arith.addf %18, %21 : vector<16x128xf32>
    %23 = arith.divf %20, %22 : vector<16x128xf32>
    %24 = math.absf %23 : vector<16x128xf32>
    %25 = arith.addf %19, %24 : vector<16x128xf32>
    %c0_8 = arith.constant 0 : index
    %c0_9 = arith.constant 0 : index
    %26 = vector.load %arg4[%c0_8, %c0_9] : memref<16x128xf32, #tpu.memory_space<vmem>>, vector<16x128xf32>
    tpu.vector_store %arg4[%c0_8, %c0_9], %25 {strides = array<i32>} : memref<16x128xf32, #tpu.memory_space<vmem>>, vector<16x128xf32>,
    %c0_i32_10 = arith.constant 0 : i32
    %27 = arith.cmpi eq, %arg0, %c0_i32_10 : i32
    %28 = arith.extui %27 : i1 to i32
    %c0_i32_11 = arith.constant 0 : i32
    %29 = arith.cmpi ne, %28, %c0_i32_11 : i32
    scf.if %29 {
      %c0_12 = arith.constant 0 : index
      %c0_13 = arith.constant 0 : index
      %30 = vector.load %arg4[%c0_12, %c0_13] : memref<16x128xf32, #tpu.memory_space<vmem>>, vector<16x128xf32>
      %31 = vector.shape_cast %30 : vector<16x128xf32> to vector<1x16x128xf32>
      %cst_14 = arith.constant dense<0.000000e+00> : vector<1xf32>
      %32 = vector.multi_reduction <add>, %31, %cst_14 [1, 2] : vector<1x16x128xf32> to vector<1xf32>
      %33 = vector.shape_cast %32 : vector<1xf32> to vector<1x1x1xf32>
      %34 = vector.extract %33[0, 0, 0] : f32 from vector<1x1x1xf32>
      %35 = vector.broadcast %34 : f32 to vector<1x1xf32>
      %cst_15 = arith.constant 0.048828125 : f32
      %36 = vector.broadcast %cst_15 : f32 to vector<1x1xf32>
      %37 = arith.mulf %35, %36 : vector<1x1xf32>
      %c0_16 = arith.constant 0 : index
      %c0_17 = arith.constant 0 : index
      %38 = vector.load %arg3[%c0_16, %c0_17] : memref<1x1xf32, #tpu.memory_space<vmem>>, vector<1x1xf32>
      tpu.vector_store %arg3[%c0_16, %c0_17], %37 {strides = array<i32>} : memref<1x1xf32, #tpu.memory_space<vmem>>, vector<1x1xf32>,
    } else {
    }
    return
  }
  func.func @transform_0(%arg0: i32) -> (i32, i32) {
    %c0_i32 = arith.constant 0 : i32
    %c0_i32_0 = arith.constant 0 : i32
    return %arg0, %c0_i32 : i32, i32
  }
  func.func @transform_1(%arg0: i32) -> (i32, i32) {
    %c0_i32 = arith.constant 0 : i32
    %c0_i32_0 = arith.constant 0 : i32
    return %arg0, %c0_i32 : i32, i32
  }
  func.func @transform_2(%arg0: i32) -> (i32, i32) {
    %c0_i32 = arith.constant 0 : i32
    %c0_i32_0 = arith.constant 0 : i32
    %c0_i32_1 = arith.constant 0 : i32
    return %c0_i32, %c0_i32_0 : i32, i32
  }
}

</mosaic_0001>

<llo_original>
// kernel: tpu_custom_call.1
$region0: #{tpu_custom_call.1}
  #allocation0 [shape = 'u32[]', space=smem, size = 0x4, offset = 0x4, fixed_abs, tag = 'smem constant byte address 0x4 - core index']
  #allocation1 [shape = 'u32[144,128]{1,0:T(1,128)}', space=vmem, size = 0x12000, scoped, tag = 'internal scratch']
  #allocation2 [shape = 'f32[16,128]{1,0:T(8,128)}', space=vmem, size = 0x2000, scoped, tag = 'scratch operand']
  %s0 = inlined_call_operand.hbm [shape: f32[16,128], index: 0, kind: input, shape index: {}]
  %s1 = inlined_call_operand.hbm [shape: f32[16,128], index: 1, kind: input, shape index: {}]
  %s2 = inlined_call_operand.hbm [shape: f32[1,1], index: 2, kind: output, shape index: {}]
  %s3 = sld [smem:[#allocation0]]
  $region34: #{tpu_custom_call.1} parent=0
    _
  %s5 = ssub.s32 1, %s3
  %s6 = scalar_select 0, %s5, %s3
  $region1: #{tpu_custom_call.1} parent=0
    #allocation3 [shape = 'u8[8192]{0}', space=vmem, size = 0x2000, scoped, tag = 'input window, operand 0, single buffered']
    #allocation4 [shape = 's32[1]{0}', space=sflag, size = 0x4, scoped, tag = 'scoped memory for tpu_custom_call.1']
    #allocation5 [shape = 's32[1]{0}', space=sflag, size = 0x4, scoped, tag = 'scoped memory for tpu_custom_call.1']
    #allocation6 [shape = 'u8[8192]{0}', space=vmem, size = 0x2000, scoped, tag = 'input window, operand 1, single buffered']
    #allocation7 [shape = 's32[1]{0}', space=sflag, size = 0x4, scoped, tag = 'scoped memory for tpu_custom_call.1']
    #allocation8 [shape = 'u8[512]{0}', space=vmem, size = 0x400, scoped, tag = 'output window, operand 0, single buffered']
    %7 = vsyncpa [#allocation4], 0
    %8 = vsyncpa [#allocation7], 0
    %9 = vsyncpa [#allocation5], 0
    // Predicated region
    $region2: #{tpu_custom_call.1} parent=1 // pred_check
      _
    $region3: #{tpu_custom_call.1} parent=1 // pred_check_branch
      %11 = sbr.rel (0) target = $region5
    $region4: #{tpu_custom_call.1} parent=1 // pred_region
      %s13 = ssub.s32 256, 256
      %14 = vsyncadd [#allocation4], %s13
      %s15 = sshll.u32 [#allocation3], 4
      %s16 = int_to_ptr.vmem [resolvable:$true] %s15
      %21 = dma.hbm_to_vmem [thread:$0]  %s0, 256, %s16, [#allocation4], 128, 128, 8
    $region5: #{tpu_custom_call.1} parent=1 // pred_fallthru
      _
    // Predicated region
    $region6: #{tpu_custom_call.1} parent=1 // pred_check
      _
    $region7: #{tpu_custom_call.1} parent=1 // pred_check_branch
      %23 = sbr.rel (0) target = $region9
    $region8: #{tpu_custom_call.1} parent=1 // pred_region
      %s25 = ssub.s32 256, 256
      %26 = vsyncadd [#allocation7], %s25
      %s27 = sshll.u32 [#allocation6], 4
      %s28 = int_to_ptr.vmem [resolvable:$true] %s27
      %33 = dma.hbm_to_vmem [thread:$0]  %s1, 256, %s28, [#allocation7], 128, 128, 8
    $region9: #{tpu_custom_call.1} parent=1 // pred_fallthru
      _
    // Predicated region
    $region10: #{tpu_custom_call.1} parent=1 // pred_check
      _
    $region11: #{tpu_custom_call.1} parent=1 // pred_check_branch
      %35 = sbr.rel (0) target = $region13
    $region12: #{tpu_custom_call.1} parent=1 // pred_region
      %36 = dma.done [#allocation4], 256
    $region13: #{tpu_custom_call.1} parent=1 // pred_fallthru
      _
    // Predicated region
    $region14: #{tpu_custom_call.1} parent=1 // pred_check
      _
    $region15: #{tpu_custom_call.1} parent=1 // pred_check_branch
      %38 = sbr.rel (0) target = $region17
    $region16: #{tpu_custom_call.1} parent=1 // pred_region
      %39 = dma.done [#allocation7], 256
    $region17: #{tpu_custom_call.1} parent=1 // pred_fallthru
      _
    %p40 = scmp.eq.s32.totalorder 0, 0
    // Predicated region
    $region18: #{tpu_custom_call.1} parent=1 // pred_check
      %p41 = pneg %p40
    $region19: #{tpu_custom_call.1} parent=1 // pred_check_branch
      %43 = sbr.rel (%p41) target = $region21
    $region20: #{tpu_custom_call.1} parent=1 // pred_region
      %44 = vst [vmem:[#allocation2] sm:$0xff] 0.0
      %45 = vst [vmem:[#allocation2 + $0x8] sm:$0xff] 0.0
    $region21: #{tpu_custom_call.1} parent=1 // pred_fallthru
      _
    %v46 = vlaneseq
    %v47 = vshrl.u32 %v46, 7
    %v48 = vadd.s32 %v47, 8
    %s49 = smul.u32 0, 16
    %v50 = vstv %s49
    %v51 = vadd.s32 %v47, %v50
    %v52 = vadd.s32 %v48, %v50
    %v53 = vlaneseq
    %v54 = vand.u32 %v53, 127
    %v55 = vmul.u32 %v51, 128
    %v56 = vmul.u32 %v52, 128
    %v57 = vadd.s32 %v55, %v54
    %v58 = vadd.s32 %v56, %v54
    %vm59 = vcmp.lt.s32.totalorder %v57, 2048
    %vm60 = vcmp.lt.s32.totalorder %v58, 2048
    %v61 = vld [vmem:[#allocation3] sm:$0xff]
    %v62 = vld [vmem:[#allocation3 + $0x8] sm:$0xff]
    %v63 = vsel %vm59, %v61, 1.0
    %v64 = vsel %vm60, %v62, 1.0
    %v65 = vld [vmem:[#allocation6] sm:$0xff]
    %v66 = vld [vmem:[#allocation6 + $0x8] sm:$0xff]
    %v67 = vsel %vm59, %v65, 1.0
    %v68 = vsel %vm60, %v66, 1.0
    %v69 = vld [vmem:[#allocation2] sm:$0xff]
    %v70 = vld [vmem:[#allocation2 + $0x8] sm:$0xff]
    %v71 = vsub.f32 %v67, %v63
    %v72 = vsub.f32 %v68, %v64
    %v73 = vadd.f32 %v67, 1e-08
    %v74 = vadd.f32 %v68, 1e-08
    %v75 = vrcp.pop %v73
    %v76 = vmul.f32 %v71, %v75
    %v77 = vrcp.pop %v74
    %v78 = vmul.f32 %v72, %v77
    %v79 = vand.u32 2147483647, %v76
    %v80 = vand.u32 2147483647, %v78
    %v81 = vadd.f32 %v69, %v79
    %v82 = vadd.f32 %v70, %v80
    %83 = vst [vmem:[#allocation2] sm:$0xff] %v81
    %84 = vst [vmem:[#allocation2 + $0x8] sm:$0xff] %v82
    // Predicated region
    $region22: #{tpu_custom_call.1} parent=1 // pred_check
      %p85 = pneg %p40
    $region23: #{tpu_custom_call.1} parent=1 // pred_check_branch
      %87 = sbr.rel (%p85) target = $region25
    $region24: #{tpu_custom_call.1} parent=1 // pred_region
      %v88 = vld [vmem:[#allocation2] sm:$0xff]
      %v89 = vld [vmem:[#allocation2 + $0x8] sm:$0xff]
      %v90 = vadd.f32 %v88, %v89
      %91 = vadd.xlane.f32.xlu0 %v90
      %v92 = vpop.xlane.xlu0 %91
      %v93 = vrot.slane %v92, 4
      %v94 = vadd.f32 %v92, %v93
      %v95 = vrot.slane %v94, 2
      %v96 = vadd.f32 %v94, %v95
      %v97 = vrot.slane %v96, 1
      %v98 = vadd.f32 %v96, %v97
      %s99 = vtos %v98
      %v100 = vstv %s99
      %v101 = vmul.f32 %v100, 0.048828125
      %vm102 = vcmask 0
      %103 = vst.msk [vmem:[#allocation8] sm:$0x1] %vm102, %v101
    $region25: #{tpu_custom_call.1} parent=1 // pred_fallthru
      _
    // Predicated region
    $region26: #{tpu_custom_call.1} parent=1 // pred_check
      _
    $region27: #{tpu_custom_call.1} parent=1 // pred_check_branch
      %105 = sbr.rel (0) target = $region29
    $region28: #{tpu_custom_call.1} parent=1 // pred_region
      %s107 = ssub.s32 16, 16
      %108 = vsyncadd [#allocation5], %s107
      %s110 = sshll.u32 [#allocation8], 4
      %s111 = int_to_ptr.vmem [resolvable:$true] %s110
      %113 = dma.vmem_to_hbm [thread:$0]  %s111, 16, %s2, [#allocation5]
    $region29: #{tpu_custom_call.1} parent=1 // pred_fallthru
      _
    // Predicated region
    $region30: #{tpu_custom_call.1} parent=1 // pred_check
      _
    $region31: #{tpu_custom_call.1} parent=1 // pred_check_branch
      %115 = sbr.rel (0) target = $region33
    $region32: #{tpu_custom_call.1} parent=1 // pred_region
      %116 = dma.done [#allocation5], 16
    $region33: #{tpu_custom_call.1} parent=1 // pred_fallthru
      _
    %117 = vsyncpa [#allocation4], 1
    %118 = vsyncpa [#allocation7], 1
    %119 = vsyncpa [#allocation5], 1

</llo_original>
